<compile_context>
chip_gen: v6e
topology: v6e:2x2x1
jax: 0.10.0
libtpu: 0.0.40
codegen_flags: <defaults>
</compile_context>

<pallas_src>
import jax
import jax.numpy as jnp
from jax import lax
from jax.experimental import pallas as pl
from jax.experimental.pallas import tpu as pltpu

T_TOTAL = 2 ** 5 - 1
WAIT_TIME = T_TOTAL  # 31


def _cdiv(a, b):
    return -(-a // b)


def _round_down_128(n):
    return (n // 128) * 128


def _round_up_128(n):
    return _cdiv(n, 128) * 128


def _vmem_capacity_bytes():
    try:
        return int(pltpu.get_tpu_info().vmem_capacity_bytes)
    except Exception:
        return 64 << 20  # conservative fallback: v7x per-TensorCore VMEM


# --------------- Pass 1: temporal mean (emitted transposed) ----------------

def time_mean_kernel(x_ref, xmt_ref):
    # x_ref: (t_eff, B, te) VMEM tile; xmt_ref: (te, B).
    xs = x_ref[...].astype(jnp.float32)                    # f32 accumulation
    m = jnp.sum(xs, axis=0) * (1.0 / xs.shape[0])          # (B, te)
    xmt_ref[...] = m.T.astype(xmt_ref.dtype)               # tiny (B x te) transpose


# ---------- Pass 2: vocab-tiled GEMV, weight streamed in native layout -----

def vocab_matmul_kernel(xmt_ref, w_ref, o_ref):
    # w_ref: (tv, E) native nn.Linear layout, streamed LHS;
    # xmt_ref: (E, B) stationary RHS  ->  canonical (M,K)@(K,N): no transposes.
    o_ref[...] = lax.dot_general(
        w_ref[...], xmt_ref[...],
        dimension_numbers=(((1,), (0,)), ((), ())),
        preferred_element_type=jnp.float32,
    ).astype(o_ref.dtype)


# ------------------------------ tiling picks --------------------------------

def _pick_te(E, B, t_eff, x_itemsize, budget_per_buffer=16 << 20):
    """Embed tile for pass 1: multiple of 128 fitting the per-buffer budget."""
    if E % 128 != 0:
        return E  # block last dim must be full when E isn't lane-aligned
    te = _round_down_128(budget_per_buffer // max(1, t_eff * B * x_itemsize))
    # NOTE: for very large B this can hit the 128 floor; tiling B as a second
    # grid axis would be the next step, but pass-1 traffic (31*B*E) is
    # negligible vs V*E for realistic vocabularies.
    return max(128, min(E, te))


def _pick_tv(V, E, w_itemsize, budget_per_buffer):
    """Vocab tile: sized by BYTES against the per-buffer budget, multiple of
    128, preferring an even grid-step count (vocab axis is "parallel" and is
    sharded across v7x's two TensorCores)."""
    tv_budget = max(128, _round_down_128(budget_per_buffer // max(1, E * w_itemsize)))
    v_pad = _round_up_128(V)
    # Small-V fast path: two balanced tiles if they fit the budget.
    half = _round_up_128(_cdiv(v_pad, 2))
    if v_pad >= 256 and half <= tv_budget:
        return half
    tv = min(tv_budget, v_pad)
    # Large V: nudge tv down a little if that makes the step count even.
    nsteps = _cdiv(V, tv)
    if nsteps > 1 and nsteps % 2 == 1:
        for cand in range(tv - 128, max(127, tv - 512), -128):
            if _cdiv(V, cand) % 2 == 0:
                return cand
    return tv


# --------------------------------- wrapper ----------------------------------

def output_layer(x, weight, *, tv=None):
    """x: (T, B, E) time-major; weight: (V, E) (PyTorch nn.Linear layout).
    Returns (B, V) == (x @ W.T)[:WAIT_TIME].mean(axis=0)."""
    T, B, E = x.shape
    V, E_w = weight.shape
    assert E == E_w, (E, E_w)

    t_eff = min(T, WAIT_TIME)            # out[:wait_time] slice semantics
    x_sl = x[:t_eff]

    # PyTorch matmuls in the (promoted) activation dtype; keep the
    # f32-accumulated mean there (no silent bf16 down-cast of f32 activations).
    xm_dtype = jnp.promote_types(x.dtype, weight.dtype)
    out_dtype = xm_dtype
    x_itemsize = jnp.dtype(x.dtype).itemsize
    xm_itemsize = jnp.dtype(xm_dtype).itemsize
    w_itemsize = jnp.dtype(weight.dtype).itemsize
    out_itemsize = jnp.dtype(out_dtype).itemsize

    vmem_cap = _vmem_capacity_bytes()
    vmem_ceiling = vmem_cap - (16 << 20)        # never request the whole VMEM

    # ---- Pass 1: temporal mean -> xm_t (E, B); x slab read exactly once ----
    te = _pick_te(E, B, t_eff, x_itemsize)
    p1_need = (2 * t_eff * B * te * x_itemsize      # double-buffered input tile
               + 2 * te * B * xm_itemsize)          # double-buffered output tile
    p1_limit = int(min(vmem_ceiling, max(32 << 20, p1_need + (8 << 20))))

    xm_t = pl.pallas_call(
        time_mean_kernel,
        out_shape=jax.ShapeDtypeStruct((E, B), xm_dtype),
        grid_spec=pltpu.PrefetchScalarGridSpec(
            num_scalar_prefetch=0,
            grid=(_cdiv(E, te),),
            in_specs=[pl.BlockSpec((t_eff, B, te), lambda j: (0, 0, j))],
            out_specs=pl.BlockSpec((te, B), lambda j: (j, 0)),
        ),
        compiler_params=pltpu.CompilerParams(
            dimension_semantics=("parallel",),
            vmem_limit_bytes=p1_limit),
    )(x_sl)

    # ---- Pass 2: vocab-tiled matmul, weight streamed in native (V, E) tiles ----
    # Per-buffer weight budget by generation: ~16 MiB on 64-MiB-VMEM parts
    # (v7x), ~28 MiB on 128-MiB parts (v5e/v6e).
    per_buf_target = (16 << 20) if vmem_cap <= (64 << 20) else (28 << 20)
    reserve = 2 * E * B * xm_itemsize + (8 << 20)   # resident xm_t + internal scratch
    per_buf = max(2 << 20, min(per_buf_target, (vmem_ceiling - reserve) // 2))
    if tv is None:
        tv = _pick_tv(V, E, w_itemsize, per_buf)
    tv = min(tv, _round_up_128(V))

    p2_need = (2 * tv * E * w_itemsize              # double-buffered weight tile
               + 2 * tv * B * out_itemsize          # double-buffered output tile
               + 2 * E * B * xm_itemsize)           # resident xm_t
    p2_limit = int(min(vmem_ceiling, max(32 << 20, p2_need + (8 << 20))))

    out_vb = pl.pallas_call(
        vocab_matmul_kernel,
        out_shape=jax.ShapeDtypeStruct((V, B), out_dtype),
        grid_spec=pltpu.PrefetchScalarGridSpec(
            num_scalar_prefetch=0,
            grid=(_cdiv(V, tv),),                   # odd V handled by boundary masking
            in_specs=[
                pl.BlockSpec((E, B), lambda j: (0, 0)),    # xm_t resident across tiles
                pl.BlockSpec((tv, E), lambda j: (j, 0)),   # native (V, E): no transpose
            ],
            out_specs=pl.BlockSpec((tv, B), lambda j: (j, 0)),
        ),
        compiler_params=pltpu.CompilerParams(
            dimension_semantics=("parallel",),
            vmem_limit_bytes=p2_limit),
    )(xm_t, weight)

    # (V, B) -> (B, V): tiny wrapper transpose (V*B elements); keeps the kernel
    # fully transpose-free and all its HBM traffic contiguous.
    return out_vb.T


if __name__ == "__main__":
    # Small shapes consistent with the forward: T > wait_time so the slice
    # matters; V=512 so the vocab grid splits into 2 balanced parallel tiles.
    T, B, E, V = 40, 2, 128, 512

    key = jax.random.PRNGKey(0)
    kx, kw = jax.random.split(key)
    x = jax.random.normal(kx, (T, B, E), dtype=jnp.float32)

    # Deterministic nn.Linear-style init: U(-1/sqrt(embed), 1/sqrt(embed)), shape (V, E).
    bound = 1.0 / (E ** 0.5)
    weight = jax.random.uniform(kw, (V, E), minval=-bound, maxval=bound,
                                dtype=jnp.float32)

    out = output_layer(x, weight)
    out = jax.block_until_ready(out)

    # Pure-JAX reference of the exact PyTorch semantics.
    ref = (x @ weight.T)[:WAIT_TIME].mean(axis=0)
    assert out.shape == (B, V), out.shape
    assert jnp.allclose(out, ref, atol=1e-4, rtol=1e-4), \
        float(jnp.max(jnp.abs(out - ref)))

    print("KERNEL_OK")
</pallas_src>

<mosaic_0001>
module attributes {stable_mosaic.version = 11 : i64} {
  func.func @time_mean_kernel(%arg0: i32, %arg1: memref<31x2x128xf32, #tpu.memory_space<vmem>>, %arg2: memref<128x2xf32, #tpu.memory_space<vmem>>) attributes {dimension_semantics = [#tpu.dimension_semantics<parallel>], iteration_bounds = array<i64: 1>, scalar_prefetch = 0 : i64, scratch_operands = 0 : i64, tpu.core_type = #tpu.core_type<tc>, window_params = [{transform_indices = @transform_0, window_bounds = array<i64: 31, 2, 128>}, {transform_indices = @transform_1, window_bounds = array<i64: 128, 2>}]} {
    %c0 = arith.constant 0 : index
    %c0_0 = arith.constant 0 : index
    %c0_1 = arith.constant 0 : index
    %0 = vector.load %arg1[%c0, %c0_0, %c0_1] : memref<31x2x128xf32, #tpu.memory_space<vmem>>, vector<31x2x128xf32>
    %cst = arith.constant dense<0.000000e+00> : vector<2x128xf32>
    %1 = vector.multi_reduction <add>, %0, %cst [0] : vector<31x2x128xf32> to vector<2x128xf32>
    %cst_2 = arith.constant 0.0322580636 : f32
    %2 = vector.broadcast %cst_2 : f32 to vector<2x128xf32>
    %3 = arith.mulf %1, %2 : vector<2x128xf32>
    %4 = tpu.transpose %3, [1, 0] : vector<2x128xf32> -> vector<128x2xf32>
    %c0_3 = arith.constant 0 : index
    %c0_4 = arith.constant 0 : index
    %5 = vector.load %arg2[%c0_3, %c0_4] : memref<128x2xf32, #tpu.memory_space<vmem>>, vector<128x2xf32>
    tpu.vector_store %arg2[%c0_3, %c0_4], %4 {strides = array<i32>} : memref<128x2xf32, #tpu.memory_space<vmem>>, vector<128x2xf32>,
    return
  }
  func.func @transform_0(%arg0: i32) -> (i32, i32, i32) {
    %c0_i32 = arith.constant 0 : i32
    %c0_i32_0 = arith.constant 0 : i32
    %c0_i32_1 = arith.constant 0 : i32
    return %c0_i32, %c0_i32_0, %arg0 : i32, i32, i32
  }
  func.func @transform_1(%arg0: i32) -> (i32, i32) {
    %c0_i32 = arith.constant 0 : i32
    %c0_i32_0 = arith.constant 0 : i32
    return %arg0, %c0_i32 : i32, i32
  }
}

</mosaic_0001>

<llo_original>
// kernel: tpu_custom_call.1
$region0: #{tpu_custom_call.1}
  #allocation0 [shape = 'u32[]', space=smem, size = 0x4, offset = 0x4, fixed_abs, tag = 'smem constant byte address 0x4 - core index']
  #allocation1 [shape = 'u32[144,128]{1,0:T(1,128)}', space=vmem, size = 0x12000, scoped, tag = 'internal scratch']
  %s0 = inlined_call_operand.hbm [shape: f32[31,2,128], index: 0, kind: input, shape index: {}]
  %s1 = inlined_call_operand.vmem [shape: f32[128,2], index: 1, kind: output, shape index: {}]
  %s2 = sld [smem:[#allocation0]]
  $region18: #{tpu_custom_call.1} parent=0
    _
  %s4 = ssub.s32 1, %s2
  %s5 = scalar_select 0, %s4, %s2
  $region1: #{tpu_custom_call.1} parent=0
    #allocation2 [shape = 'u8[31744]{0}', space=vmem, size = 0x7c00, scoped, tag = 'input window, operand 0, single buffered']
    #allocation3 [shape = 's32[1]{0}', space=sflag, size = 0x4, scoped, tag = 'scoped memory for tpu_custom_call.1']
    %6 = vsyncpa [#allocation3], 0
    // Predicated region
    $region2: #{tpu_custom_call.1} parent=1 // pred_check
      _
    $region3: #{tpu_custom_call.1} parent=1 // pred_check_branch
      %8 = sbr.rel (0) target = $region5
    $region4: #{tpu_custom_call.1} parent=1 // pred_region
      %s10 = ssub.s32 992, 992
      %11 = vsyncadd [#allocation3], %s10
      %s12 = sshll.u32 [#allocation2], 4
      %s13 = int_to_ptr.vmem [resolvable:$true] %s12
      %18 = dma.hbm_to_vmem [thread:$0]  %s0, 992, %s13, [#allocation3], 32, 32, 2
    $region5: #{tpu_custom_call.1} parent=1 // pred_fallthru
      _
    // Predicated region
    $region6: #{tpu_custom_call.1} parent=1 // pred_check
      _
    $region7: #{tpu_custom_call.1} parent=1 // pred_check_branch
      %20 = sbr.rel (0) target = $region9
    $region8: #{tpu_custom_call.1} parent=1 // pred_region
      %21 = dma.done [#allocation3], 992
    $region9: #{tpu_custom_call.1} parent=1 // pred_fallthru
      _
    %v22 = vld [vmem:[#allocation2] sm:$0x3]
    %v23 = vld [vmem:[#allocation2 + $0x2] sm:$0x3]
    %v24 = vld [vmem:[#allocation2 + $0x4] sm:$0x3]
    %v25 = vld [vmem:[#allocation2 + $0x6] sm:$0x3]
    %v26 = vld [vmem:[#allocation2 + $0x8] sm:$0x3]
    %v27 = vld [vmem:[#allocation2 + $0xa] sm:$0x3]
    %v28 = vld [vmem:[#allocation2 + $0xc] sm:$0x3]
    %v29 = vld [vmem:[#allocation2 + $0xe] sm:$0x3]
    %v30 = vld [vmem:[#allocation2 + $0x10] sm:$0x3]
    %v31 = vld [vmem:[#allocation2 + $0x12] sm:$0x3]
    %v32 = vld [vmem:[#allocation2 + $0x14] sm:$0x3]
    %v33 = vld [vmem:[#allocation2 + $0x16] sm:$0x3]
    %v34 = vld [vmem:[#allocation2 + $0x18] sm:$0x3]
    %v35 = vld [vmem:[#allocation2 + $0x1a] sm:$0x3]
    %v36 = vld [vmem:[#allocation2 + $0x1c] sm:$0x3]
    %v37 = vld [vmem:[#allocation2 + $0x1e] sm:$0x3]
    %v38 = vld [vmem:[#allocation2 + $0x20] sm:$0x3]
    %v39 = vld [vmem:[#allocation2 + $0x22] sm:$0x3]
    %v40 = vld [vmem:[#allocation2 + $0x24] sm:$0x3]
    %v41 = vld [vmem:[#allocation2 + $0x26] sm:$0x3]
    %v42 = vld [vmem:[#allocation2 + $0x28] sm:$0x3]
    %v43 = vld [vmem:[#allocation2 + $0x2a] sm:$0x3]
    %v44 = vld [vmem:[#allocation2 + $0x2c] sm:$0x3]
    %v45 = vld [vmem:[#allocation2 + $0x2e] sm:$0x3]
    %v46 = vld [vmem:[#allocation2 + $0x30] sm:$0x3]
    %v47 = vld [vmem:[#allocation2 + $0x32] sm:$0x3]
    %v48 = vld [vmem:[#allocation2 + $0x34] sm:$0x3]
    %v49 = vld [vmem:[#allocation2 + $0x36] sm:$0x3]
    %v50 = vld [vmem:[#allocation2 + $0x38] sm:$0x3]
    %v51 = vld [vmem:[#allocation2 + $0x3a] sm:$0x3]
    %v52 = vld [vmem:[#allocation2 + $0x3c] sm:$0x3]
    %vm53 = vcmask 1041408
    %v54 = vsel %vm53, %v22, 0.0
    %v55 = vsel %vm53, %v23, 0.0
    %v56 = vadd.f32 %v54, %v55
    %v57 = vsel %vm53, %v24, 0.0
    %v58 = vadd.f32 %v56, %v57
    %v59 = vsel %vm53, %v25, 0.0
    %v60 = vadd.f32 %v58, %v59
    %v61 = vsel %vm53, %v26, 0.0
    %v62 = vadd.f32 %v60, %v61
    %v63 = vsel %vm53, %v27, 0.0
    %v64 = vadd.f32 %v62, %v63
    %v65 = vsel %vm53, %v28, 0.0
    %v66 = vadd.f32 %v64, %v65
    %v67 = vsel %vm53, %v29, 0.0
    %v68 = vadd.f32 %v66, %v67
    %v69 = vsel %vm53, %v30, 0.0
    %v70 = vadd.f32 %v68, %v69
    %v71 = vsel %vm53, %v31, 0.0
    %v72 = vadd.f32 %v70, %v71
    %v73 = vsel %vm53, %v32, 0.0
    %v74 = vadd.f32 %v72, %v73
    %v75 = vsel %vm53, %v33, 0.0
    %v76 = vadd.f32 %v74, %v75
    %v77 = vsel %vm53, %v34, 0.0
    %v78 = vadd.f32 %v76, %v77
    %v79 = vsel %vm53, %v35, 0.0
    %v80 = vadd.f32 %v78, %v79
    %v81 = vsel %vm53, %v36, 0.0
    %v82 = vadd.f32 %v80, %v81
    %v83 = vsel %vm53, %v37, 0.0
    %v84 = vadd.f32 %v82, %v83
    %v85 = vsel %vm53, %v38, 0.0
    %v86 = vadd.f32 %v84, %v85
    %v87 = vsel %vm53, %v39, 0.0
    %v88 = vadd.f32 %v86, %v87
    %v89 = vsel %vm53, %v40, 0.0
    %v90 = vadd.f32 %v88, %v89
    %v91 = vsel %vm53, %v41, 0.0
    %v92 = vadd.f32 %v90, %v91
    %v93 = vsel %vm53, %v42, 0.0
    %v94 = vadd.f32 %v92, %v93
    %v95 = vsel %vm53, %v43, 0.0
    %v96 = vadd.f32 %v94, %v95
    %v97 = vsel %vm53, %v44, 0.0
    %v98 = vadd.f32 %v96, %v97
    %v99 = vsel %vm53, %v45, 0.0
    %v100 = vadd.f32 %v98, %v99
    %v101 = vsel %vm53, %v46, 0.0
    %v102 = vadd.f32 %v100, %v101
    %v103 = vsel %vm53, %v47, 0.0
    %v104 = vadd.f32 %v102, %v103
    %v105 = vsel %vm53, %v48, 0.0
    %v106 = vadd.f32 %v104, %v105
    %v107 = vsel %vm53, %v49, 0.0
    %v108 = vadd.f32 %v106, %v107
    %v109 = vsel %vm53, %v50, 0.0
    %v110 = vadd.f32 %v108, %v109
    %v111 = vsel %vm53, %v51, 0.0
    %v112 = vadd.f32 %v110, %v111
    %v113 = vsel %vm53, %v52, 0.0
    %v114 = vadd.f32 %v112, %v113
    %v115 = vmul.f32 %v114, 0.032258064
    %116 = vxpose.xlu0.b32.start [1/16] %v115, 128
    %117 = vxpose.xlu0.b32.cont [2/16] 0.0, 128
    %118 = vxpose.xlu0.b32.cont [3/16] 0.0, 128
    %119 = vxpose.xlu0.b32.cont [4/16] 0.0, 128
    %120 = vxpose.xlu0.b32.cont [5/16] 0.0, 128
    %121 = vxpose.xlu0.b32.cont [6/16] 0.0, 128
    %122 = vxpose.xlu0.b32.cont [7/16] 0.0, 128
    %123 = vxpose.xlu0.b32.cont [8/16] 0.0, 128
    %124 = vxpose.xlu0.b32.cont [9/16] 0.0, 128
    %125 = vxpose.xlu0.b32.cont [10/16] 0.0, 128
    %126 = vxpose.xlu0.b32.cont [11/16] 0.0, 128
    %127 = vxpose.xlu0.b32.cont [12/16] 0.0, 128
    %128 = vxpose.xlu0.b32.cont [13/16] 0.0, 128
    %129 = vxpose.xlu0.b32.cont [14/16] 0.0, 128
    %130 = vxpose.xlu0.b32.cont [15/16] 0.0, 128
    %131 = vxpose.xlu0.b32.end [16/16] 0.0, 128
    %v132 = vpop.trf.xlu0
    %v133 = vpop.trf.xlu0
    %v134 = vpop.trf.xlu0
    %v135 = vpop.trf.xlu0
    %v136 = vpop.trf.xlu0
    %v137 = vpop.trf.xlu0
    %v138 = vpop.trf.xlu0
    %v139 = vpop.trf.xlu0
    %v140 = vpop.trf.xlu0
    %v141 = vpop.trf.xlu0
    %v142 = vpop.trf.xlu0
    %v143 = vpop.trf.xlu0
    %v144 = vpop.trf.xlu0
    %v145 = vpop.trf.xlu0
    %v146 = vpop.trf.xlu0
    %v147 = vpop.trf.xlu0
    %vm148 = vcmask 15360
    %149 = vst.msk [vmem:[%s1] sm:$0xff] %vm148, %v132
    %150 = vst.msk [vmem:[%s1 + $0x8] sm:$0xff] %vm148, %v133
    %151 = vst.msk [vmem:[%s1 + $0x10] sm:$0xff] %vm148, %v134
    %152 = vst.msk [vmem:[%s1 + $0x18] sm:$0xff] %vm148, %v135
    %153 = vst.msk [vmem:[%s1 + $0x20] sm:$0xff] %vm148, %v136
    %154 = vst.msk [vmem:[%s1 + $0x28] sm:$0xff] %vm148, %v137
    %155 = vst.msk [vmem:[%s1 + $0x30] sm:$0xff] %vm148, %v138
    %156 = vst.msk [vmem:[%s1 + $0x38] sm:$0xff] %vm148, %v139
    %157 = vst.msk [vmem:[%s1 + $0x40] sm:$0xff] %vm148, %v140
    %158 = vst.msk [vmem:[%s1 + $0x48] sm:$0xff] %vm148, %v141
    %159 = vst.msk [vmem:[%s1 + $0x50] sm:$0xff] %vm148, %v142
    %160 = vst.msk [vmem:[%s1 + $0x58] sm:$0xff] %vm148, %v143
    %161 = vst.msk [vmem:[%s1 + $0x60] sm:$0xff] %vm148, %v144
    %162 = vst.msk [vmem:[%s1 + $0x68] sm:$0xff] %vm148, %v145
    %163 = vst.msk [vmem:[%s1 + $0x70] sm:$0xff] %vm148, %v146
    %164 = vst.msk [vmem:[%s1 + $0x78] sm:$0xff] %vm148, %v147
    // Predicated region
    $region10: #{tpu_custom_call.1} parent=1 // pred_check
      _
    $region11: #{tpu_custom_call.1} parent=1 // pred_check_branch
      %166 = sbr.rel (0) target = $region13
    $region12: #{tpu_custom_call.1} parent=1 // pred_region
      _
    $region13: #{tpu_custom_call.1} parent=1 // pred_fallthru
      _
    // Predicated region
    $region14: #{tpu_custom_call.1} parent=1 // pred_check
      _
    $region15: #{tpu_custom_call.1} parent=1 // pred_check_branch
      %168 = sbr.rel (0) target = $region17
    $region16: #{tpu_custom_call.1} parent=1 // pred_region
      _
    $region17: #{tpu_custom_call.1} parent=1 // pred_fallthru
      _
    %169 = vsyncpa [#allocation3], 1

</llo_original>
